<compile_context>
chip_gen: v5e
topology: v5e:2x2
jax: 0.10.0
libtpu: 0.0.40
codegen_flags: <defaults>
</compile_context>

<pallas_src>
import jax
import jax.numpy as jnp
from jax.experimental import pallas as pl
from jax.experimental.pallas import tpu as pltpu


def vqa_kernel(img_ref, q_ref, wi_ref, wq_ref, w1_ref, w2_ref, bias_ref, out_ref):
    E = wi_ref.shape[1]          # embedding size
    H = w1_ref.shape[1]          # fusion hidden units
    A = w2_ref.shape[1]          # n_answers
    S = q_ref.shape[1]           # question seq length

    # Packed biases (f32): row 0 = bi, 1 = bq, 2 = b1, 3 = b2 (static slices).
    bi = bias_ref[0:1, 0:E]
    bq = bias_ref[1:2, 0:E]
    b1 = bias_ref[2:3, 0:H]
    b2 = bias_ref[3:4, 0:A]

    # --- image encoder: (B, C*H*W) bf16 x (C*H*W, E) bf16 -> f32 on MXU ---
    img_emb = jnp.dot(img_ref[...], wi_ref[...],
                      preferred_element_type=jnp.float32) + bi

    # --- question encoder: mean-pool over seq in-kernel, then linear ---
    q_pooled = (jnp.sum(q_ref[...], axis=1) * (1.0 / S)).astype(wq_ref.dtype)
    q_emb = jnp.dot(q_pooled, wq_ref[...],
                    preferred_element_type=jnp.float32) + bq

    # --- fusion: element-wise multiply + tanh (kept in f32 on VPU/EUP) ---
    fused = jnp.tanh(img_emb * q_emb)
    # TODO(synk): training-mode dropout (pltpu.prng_random_bits mask) not
    # implemented; PyTorch eval mode makes dropout an identity.

    # --- fc1 + tanh ---
    h = jnp.tanh(jnp.dot(fused.astype(w1_ref.dtype), w1_ref[...],
                         preferred_element_type=jnp.float32) + b1)

    # --- fc2 ---
    out = jnp.dot(h.astype(w2_ref.dtype), w2_ref[...],
                  preferred_element_type=jnp.float32) + b2
    out_ref[...] = out.astype(out_ref.dtype)


def _full_block(shape):
    # Gridless pallas_call -> index_map takes no grid args; whole array = one block.
    return pl.BlockSpec(shape, lambda: (0,) * len(shape))


def vqa_forward(image, question, params):
    """image: (B, C, H, W) float32 NCHW; question: (B, S, Dq) float32."""
    wi, bi, wq, bq, w1, b1, w2, b2 = params
    B = image.shape[0]
    S = question.shape[1]
    Dq = question.shape[2]
    img_feat = wi.shape[0]
    E = wi.shape[1]
    H = w1.shape[1]
    A = w2.shape[1]

    # Pad batch up to a multiple of 8 (f32 sublane tile); slice result back.
    B_pad = max(8, ((B + 7) // 8) * 8)
    pad = B_pad - B

    # Flatten image row-major (matches torch .view) in the wrapper; cast MXU
    # LHS operands and weights to bf16, keep biases / elementwise in f32.
    img_flat = image.reshape(B, -1)
    img_flat = jnp.pad(img_flat, ((0, pad), (0, 0))).astype(jnp.bfloat16)
    question_p = jnp.pad(question, ((0, pad), (0, 0), (0, 0)))  # f32, pooled in-kernel

    wi_b = wi.astype(jnp.bfloat16)
    wq_b = wq.astype(jnp.bfloat16)
    w1_b = w1.astype(jnp.bfloat16)
    w2_b = w2.astype(jnp.bfloat16)

    # Pack biases into a single lane-aligned (8, maxF) f32 buffer.
    max_f = ((max(E, H, A) + 127) // 128) * 128
    bias_pack = jnp.zeros((8, max_f), jnp.float32)
    bias_pack = bias_pack.at[0, :E].set(bi[0])
    bias_pack = bias_pack.at[1, :E].set(bq[0])
    bias_pack = bias_pack.at[2, :H].set(b1[0])
    bias_pack = bias_pack.at[3, :A].set(b2[0])

    args = (img_flat, question_p, wi_b, wq_b, w1_b, w2_b, bias_pack)

    flops = 2 * B_pad * (img_feat * E + Dq * E + E * H + H * A)
    transcendentals = B_pad * (E + H)
    bytes_accessed = sum(a.size * a.dtype.itemsize for a in args) + B_pad * A * 4

    out_padded = pl.pallas_call(
        vqa_kernel,
        out_shape=jax.ShapeDtypeStruct((B_pad, A), jnp.float32),
        in_specs=[_full_block(a.shape) for a in args],
        out_specs=_full_block((B_pad, A)),
        cost_estimate=pl.CostEstimate(
            flops=flops,
            transcendentals=transcendentals,
            bytes_accessed=bytes_accessed,
        ),
        compiler_params=pltpu.CompilerParams(vmem_limit_bytes=32 * 1024 * 1024),
    )(*args)

    return out_padded[:B]


def init_params(key, img_feat_dim, q_feat_dim, embed_dim, fusion_hidden, n_answers):
    ks = jax.random.split(key, 8)

    def lin(kw, kb, fan_in, fan_out):
        w = jax.random.normal(kw, (fan_in, fan_out), jnp.float32) * (1.0 / jnp.sqrt(fan_in))
        b = jax.random.normal(kb, (1, fan_out), jnp.float32) * 0.01
        return w, b

    wi, bi = lin(ks[0], ks[1], img_feat_dim, embed_dim)     # image encoder
    wq, bq = lin(ks[2], ks[3], q_feat_dim, embed_dim)       # question encoder
    w1, b1 = lin(ks[4], ks[5], embed_dim, fusion_hidden)    # fc1
    w2, b2 = lin(ks[6], ks[7], fusion_hidden, n_answers)    # fc2
    return (wi, bi, wq, bq, w1, b1, w2, b2)


if __name__ == "__main__":
    key = jax.random.PRNGKey(0)
    k_img, k_q, k_p = jax.random.split(key, 3)

    # Small shapes consistent with the module's forward.
    B, C, H, W = 2, 4, 16, 16          # image: NCHW  -> img_feat = 1024
    S, Dq = 8, 32                      # question: (B, seq, hidden)
    EMBED = 128                        # image_encoder.embedding_size
    FUSION_HIDDEN = 256                # fusion_hidden_units (scaled-down)
    N_ANSWERS = 128                    # n_answers (scaled-down, lane-aligned)

    image = jax.random.normal(k_img, (B, C, H, W), jnp.float32)
    question = jax.random.normal(k_q, (B, S, Dq), jnp.float32)
    params = init_params(k_p, C * H * W, Dq, EMBED, FUSION_HIDDEN, N_ANSWERS)

    out = vqa_forward(image, question, params)
    out = jax.block_until_ready(out)

    # Pure-JAX reference with the same bf16 weight / f32 accumulate recipe.
    wi, bi, wq, bq, w1, b1, w2, b2 = params
    wi_b, wq_b = wi.astype(jnp.bfloat16), wq.astype(jnp.bfloat16)
    w1_b, w2_b = w1.astype(jnp.bfloat16), w2.astype(jnp.bfloat16)

    img_flat = image.reshape(B, -1).astype(jnp.bfloat16)
    img_emb = jnp.dot(img_flat, wi_b, preferred_element_type=jnp.float32) + bi
    q_pooled = jnp.mean(question, axis=1).astype(jnp.bfloat16)
    q_emb = jnp.dot(q_pooled, wq_b, preferred_element_type=jnp.float32) + bq
    fused = jnp.tanh(img_emb * q_emb)
    h_ref = jnp.tanh(jnp.dot(fused.astype(jnp.bfloat16), w1_b,
                             preferred_element_type=jnp.float32) + b1)
    ref = jnp.dot(h_ref.astype(jnp.bfloat16), w2_b,
                  preferred_element_type=jnp.float32) + b2

    assert out.shape == (B, N_ANSWERS)
    assert jnp.allclose(out, ref, atol=2e-2, rtol=2e-2), float(jnp.max(jnp.abs(out - ref)))

    print("KERNEL_OK")
</pallas_src>

<mosaic_0001>
module attributes {stable_mosaic.version = 11 : i64} {
  func.func @vqa_kernel(%arg0: memref<8x1024xbf16, #tpu.memory_space<vmem>>, %arg1: memref<8x8x32xf32, #tpu.memory_space<vmem>>, %arg2: memref<1024x128xbf16, #tpu.memory_space<vmem>>, %arg3: memref<32x128xbf16, #tpu.memory_space<vmem>>, %arg4: memref<128x256xbf16, #tpu.memory_space<vmem>>, %arg5: memref<256x128xbf16, #tpu.memory_space<vmem>>, %arg6: memref<8x256xf32, #tpu.memory_space<vmem>>, %arg7: memref<8x128xf32, #tpu.memory_space<vmem>>) attributes {dimension_semantics = [], scalar_prefetch = 0 : i64, scratch_operands = 0 : i64, tpu.core_type = #tpu.core_type<tc>} {
    %c0 = arith.constant 0 : index
    %c0_0 = arith.constant 0 : index
    %0 = vector.load %arg6[%c0, %c0_0] : memref<8x256xf32, #tpu.memory_space<vmem>>, vector<1x128xf32>
    %c1 = arith.constant 1 : index
    %c0_1 = arith.constant 0 : index
    %1 = vector.load %arg6[%c1, %c0_1] : memref<8x256xf32, #tpu.memory_space<vmem>>, vector<1x128xf32>
    %c2 = arith.constant 2 : index
    %c0_2 = arith.constant 0 : index
    %2 = vector.load %arg6[%c2, %c0_2] : memref<8x256xf32, #tpu.memory_space<vmem>>, vector<1x256xf32>
    %c3 = arith.constant 3 : index
    %c0_3 = arith.constant 0 : index
    %3 = vector.load %arg6[%c3, %c0_3] : memref<8x256xf32, #tpu.memory_space<vmem>>, vector<1x128xf32>
    %c0_4 = arith.constant 0 : index
    %c0_5 = arith.constant 0 : index
    %4 = vector.load %arg0[%c0_4, %c0_5] : memref<8x1024xbf16, #tpu.memory_space<vmem>>, vector<8x1024xbf16>
    %c0_6 = arith.constant 0 : index
    %c0_7 = arith.constant 0 : index
    %5 = vector.load %arg2[%c0_6, %c0_7] : memref<1024x128xbf16, #tpu.memory_space<vmem>>, vector<1024x128xbf16>
    %cst = arith.constant dense<0.000000e+00> : vector<8x128xf32>
    %6 = tpu.matmul %4, %5, %cst {dimension_numbers = #tpu.dot_dimension_numbers<[1], [0], [0], [1], [0, 0, 1, 1], [], []>} : vector<8x1024xbf16>, vector<1024x128xbf16>, vector<8x128xf32> -> vector<8x128xf32>
    %7 = vector.broadcast %0 : vector<1x128xf32> to vector<8x128xf32>
    %8 = arith.addf %6, %7 : vector<8x128xf32>
    %c0_8 = arith.constant 0 : index
    %c0_9 = arith.constant 0 : index
    %c0_10 = arith.constant 0 : index
    %9 = vector.load %arg1[%c0_8, %c0_9, %c0_10] : memref<8x8x32xf32, #tpu.memory_space<vmem>>, vector<8x8x32xf32>
    %cst_11 = arith.constant dense<0.000000e+00> : vector<8x32xf32>
    %10 = vector.multi_reduction <add>, %9, %cst_11 [1] : vector<8x8x32xf32> to vector<8x32xf32>
    %cst_12 = arith.constant 1.250000e-01 : f32
    %11 = vector.broadcast %cst_12 : f32 to vector<8x32xf32>
    %12 = arith.mulf %10, %11 : vector<8x32xf32>
    %13 = arith.truncf %12 : vector<8x32xf32> to vector<8x32xbf16>
    %c0_13 = arith.constant 0 : index
    %c0_14 = arith.constant 0 : index
    %14 = vector.load %arg3[%c0_13, %c0_14] : memref<32x128xbf16, #tpu.memory_space<vmem>>, vector<32x128xbf16>
    %cst_15 = arith.constant dense<0.000000e+00> : vector<8x128xf32>
    %15 = tpu.matmul %13, %14, %cst_15 {dimension_numbers = #tpu.dot_dimension_numbers<[1], [0], [0], [1], [0, 0, 1, 1], [], []>} : vector<8x32xbf16>, vector<32x128xbf16>, vector<8x128xf32> -> vector<8x128xf32>
    %16 = vector.broadcast %1 : vector<1x128xf32> to vector<8x128xf32>
    %17 = arith.addf %15, %16 : vector<8x128xf32>
    %18 = arith.mulf %8, %17 : vector<8x128xf32>
    %19 = math.tanh %18 : vector<8x128xf32>
    %20 = arith.truncf %19 : vector<8x128xf32> to vector<8x128xbf16>
    %c0_16 = arith.constant 0 : index
    %c0_17 = arith.constant 0 : index
    %21 = vector.load %arg4[%c0_16, %c0_17] : memref<128x256xbf16, #tpu.memory_space<vmem>>, vector<128x256xbf16>
    %cst_18 = arith.constant dense<0.000000e+00> : vector<8x256xf32>
    %22 = tpu.matmul %20, %21, %cst_18 {dimension_numbers = #tpu.dot_dimension_numbers<[1], [0], [0], [1], [0, 0, 1, 1], [], []>} : vector<8x128xbf16>, vector<128x256xbf16>, vector<8x256xf32> -> vector<8x256xf32>
    %23 = vector.broadcast %2 : vector<1x256xf32> to vector<8x256xf32>
    %24 = arith.addf %22, %23 : vector<8x256xf32>
    %25 = math.tanh %24 : vector<8x256xf32>
    %26 = arith.truncf %25 : vector<8x256xf32> to vector<8x256xbf16>
    %c0_19 = arith.constant 0 : index
    %c0_20 = arith.constant 0 : index
    %27 = vector.load %arg5[%c0_19, %c0_20] : memref<256x128xbf16, #tpu.memory_space<vmem>>, vector<256x128xbf16>
    %cst_21 = arith.constant dense<0.000000e+00> : vector<8x128xf32>
    %28 = tpu.matmul %26, %27, %cst_21 {dimension_numbers = #tpu.dot_dimension_numbers<[1], [0], [0], [1], [0, 0, 1, 1], [], []>} : vector<8x256xbf16>, vector<256x128xbf16>, vector<8x128xf32> -> vector<8x128xf32>
    %29 = vector.broadcast %3 : vector<1x128xf32> to vector<8x128xf32>
    %30 = arith.addf %28, %29 : vector<8x128xf32>
    %c0_22 = arith.constant 0 : index
    %c0_23 = arith.constant 0 : index
    %31 = vector.load %arg7[%c0_22, %c0_23] : memref<8x128xf32, #tpu.memory_space<vmem>>, vector<8x128xf32>
    tpu.vector_store %arg7[%c0_22, %c0_23], %30 {strides = array<i32>} : memref<8x128xf32, #tpu.memory_space<vmem>>, vector<8x128xf32>,
    return
  }
}

</mosaic_0001>

<llo_original>
// kernel: tpu_custom_call.1
$region0: #{tpu_custom_call.1}
  #allocation0 [shape = 'u32[]', space=smem, size = 0x4, offset = 0x4, fixed_abs, tag = 'smem constant byte address 0x4 - core index']
  #allocation1 [shape = 'u32[72,128]{1,0:T(1,128)}', space=vmem, size = 0x9000, scoped, tag = 'internal scratch']
  %s0 = inlined_call_operand.hbm [shape: bf16[8,1024], index: 0, kind: input, shape index: {}]
  %s1 = inlined_call_operand.hbm [shape: f32[8,8,32], index: 1, kind: input, shape index: {}]
  %s2 = inlined_call_operand.hbm [shape: bf16[1024,128], index: 2, kind: input, shape index: {}]
  %s3 = inlined_call_operand.hbm [shape: bf16[32,128], index: 3, kind: input, shape index: {}]
  %s4 = inlined_call_operand.hbm [shape: bf16[128,256], index: 4, kind: input, shape index: {}]
  %s5 = inlined_call_operand.hbm [shape: bf16[256,128], index: 5, kind: input, shape index: {}]
  %s6 = inlined_call_operand.hbm [shape: f32[8,256], index: 6, kind: input, shape index: {}]
  %s7 = inlined_call_operand.hbm [shape: f32[8,128], index: 7, kind: output, shape index: {}]
  %s8 = sld [smem:[#allocation0]]
  $region66: #{tpu_custom_call.1} parent=0
    _
  %s10 = ssub.s32 1, %s8
  %s11 = scalar_select 0, %s10, %s8
  $region1: #{tpu_custom_call.1} parent=0
    #allocation2 [shape = 'u8[16384]{0}', space=vmem, size = 0x4000, scoped, tag = 'input window, operand 0, single buffered']
    #allocation3 [shape = 's32[1]{0}', space=sflag, size = 0x4, scoped, tag = 'scoped memory for tpu_custom_call.1']
    #allocation4 [shape = 's32[1]{0}', space=sflag, size = 0x4, scoped, tag = 'scoped memory for tpu_custom_call.1']
    #allocation5 [shape = 'u8[32768]{0}', space=vmem, size = 0x8000, scoped, tag = 'input window, operand 1, single buffered']
    #allocation6 [shape = 's32[1]{0}', space=sflag, size = 0x4, scoped, tag = 'scoped memory for tpu_custom_call.1']
    #allocation7 [shape = 'u8[262144]{0}', space=vmem, size = 0x40000, scoped, tag = 'input window, operand 2, single buffered']
    #allocation8 [shape = 'u8[8192]{0}', space=vmem, size = 0x2000, scoped, tag = 'input window, operand 3, single buffered']
    #allocation9 [shape = 's32[1]{0}', space=sflag, size = 0x4, scoped, tag = 'scoped memory for tpu_custom_call.1']
    #allocation10 [shape = 'u8[65536]{0}', space=vmem, size = 0x10000, scoped, tag = 'input window, operand 4, single buffered']
    #allocation11 [shape = 'u8[65536]{0}', space=vmem, size = 0x10000, scoped, tag = 'input window, operand 5, single buffered']
    #allocation12 [shape = 's32[1]{0}', space=sflag, size = 0x4, scoped, tag = 'scoped memory for tpu_custom_call.1']
    #allocation13 [shape = 'u8[8192]{0}', space=vmem, size = 0x2000, scoped, tag = 'input window, operand 6, single buffered']
    #allocation14 [shape = 'u8[4096]{0}', space=vmem, size = 0x1000, scoped, tag = 'output window, operand 0, single buffered']
    %12 = vsyncpa [#allocation3], 0
    %13 = vsyncpa [#allocation6], 0
    %14 = vsyncpa [#allocation9], 0
    %15 = vsyncpa [#allocation12], 0
    %16 = vsyncpa [#allocation4], 0
    // Predicated region
    $region2: #{tpu_custom_call.1} parent=1 // pred_check
      _
    $region3: #{tpu_custom_call.1} parent=1 // pred_check_branch
      %18 = sbr.rel (0) target = $region5
    $region4: #{tpu_custom_call.1} parent=1 // pred_region
      %20 = vsyncadd [#allocation3], 0
      %s22 = sshll.u32 %s0, 4
      %s23 = int_to_ptr.hbm [resolvable:$true] %s22
      %s24 = sshll.u32 [#allocation2], 4
      %s25 = int_to_ptr.vmem [resolvable:$true] %s24
      %27 = dma.hbm_to_vmem [thread:$0]  %s23, 512, %s25, [#allocation3]
    $region5: #{tpu_custom_call.1} parent=1 // pred_fallthru
      _
    // Predicated region
    $region6: #{tpu_custom_call.1} parent=1 // pred_check
      _
    $region7: #{tpu_custom_call.1} parent=1 // pred_check_branch
      %29 = sbr.rel (0) target = $region9
    $region8: #{tpu_custom_call.1} parent=1 // pred_region
      %31 = vsyncadd [#allocation6], 0
      %s32 = sshll.u32 %s1, 4
      %s33 = int_to_ptr.hbm [resolvable:$true] %s32
      %s34 = sshll.u32 [#allocation5], 4
      %s35 = int_to_ptr.vmem [resolvable:$true] %s34
      %40 = dma.hbm_to_vmem [thread:$0]  %s33, 1024, %s35, [#allocation6], 128, 128, 8
    $region9: #{tpu_custom_call.1} parent=1 // pred_fallthru
      _
    // Predicated region
    $region10: #{tpu_custom_call.1} parent=1 // pred_check
      _
    $region11: #{tpu_custom_call.1} parent=1 // pred_check_branch
      %42 = sbr.rel (0) target = $region13
    $region12: #{tpu_custom_call.1} parent=1 // pred_region
      %44 = vsyncadd [#allocation6], 0
      %s45 = sshll.u32 %s2, 4
      %s46 = int_to_ptr.hbm [resolvable:$true] %s45
      %s47 = sshll.u32 [#allocation7], 4
      %s48 = int_to_ptr.vmem [resolvable:$true] %s47
      %53 = dma.hbm_to_vmem [thread:$0]  %s46, 8192, %s48, [#allocation6], 64, 64, 4
    $region13: #{tpu_custom_call.1} parent=1 // pred_fallthru
      _
    // Predicated region
    $region14: #{tpu_custom_call.1} parent=1 // pred_check
      _
    $region15: #{tpu_custom_call.1} parent=1 // pred_check_branch
      %55 = sbr.rel (0) target = $region17
    $region16: #{tpu_custom_call.1} parent=1 // pred_region
      %57 = vsyncadd [#allocation9], 0
      %s58 = sshll.u32 %s3, 4
      %s59 = int_to_ptr.hbm [resolvable:$true] %s58
      %s60 = sshll.u32 [#allocation8], 4
      %s61 = int_to_ptr.vmem [resolvable:$true] %s60
      %66 = dma.hbm_to_vmem [thread:$0]  %s59, 256, %s61, [#allocation9], 64, 64, 4
    $region17: #{tpu_custom_call.1} parent=1 // pred_fallthru
      _
    // Predicated region
    $region18: #{tpu_custom_call.1} parent=1 // pred_check
      _
    $region19: #{tpu_custom_call.1} parent=1 // pred_check_branch
      %68 = sbr.rel (0) target = $region21
    $region20: #{tpu_custom_call.1} parent=1 // pred_region
      %70 = vsyncadd [#allocation9], 0
      %s71 = sshll.u32 %s4, 4
      %s72 = int_to_ptr.hbm [resolvable:$true] %s71
      %s73 = sshll.u32 [#allocation10], 4
      %s74 = int_to_ptr.vmem [resolvable:$true] %s73
      %79 = dma.hbm_to_vmem [thread:$0]  %s72, 2048, %s74, [#allocation9], 128, 128, 8
    $region21: #{tpu_custom_call.1} parent=1 // pred_fallthru
      _
    // Predicated region
    $region22: #{tpu_custom_call.1} parent=1 // pred_check
      _
    $region23: #{tpu_custom_call.1} parent=1 // pred_check_branch
      %81 = sbr.rel (0) target = $region25
    $region24: #{tpu_custom_call.1} parent=1 // pred_region
      %83 = vsyncadd [#allocation12], 0
      %s84 = sshll.u32 %s5, 4
      %s85 = int_to_ptr.hbm [resolvable:$true] %s84
      %s86 = sshll.u32 [#allocation11], 4
      %s87 = int_to_ptr.vmem [resolvable:$true] %s86
      %92 = dma.hbm_to_vmem [thread:$0]  %s85, 2048, %s87, [#allocation12], 64, 64, 4
    $region25: #{tpu_custom_call.1} parent=1 // pred_fallthru
      _
    // Predicated region
    $region26: #{tpu_custom_call.1} parent=1 // pred_check
      _
    $region27: #{tpu_custom_call.1} parent=1 // pred_check_branch
      %94 = sbr.rel (0) target = $region29
    $region28: #{tpu_custom_call.1} parent=1 // pred_region
      %96 = vsyncadd [#allocation12], 0
      %s98 = sshll.u32 %s6, 4
      %s99 = int_to_ptr.hbm [resolvable:$true] %s98
      %s100 = sshll.u32 [#allocation13], 4
      %s101 = int_to_ptr.vmem [resolvable:$true] %s100
      %103 = dma.hbm_to_vmem [thread:$0]  %s99, 256, %s101, [#allocation12]
    $region29: #{tpu_custom_call.1} parent=1 // pred_fallthru
      _
    // Predicated region
    $region30: #{tpu_custom_call.1} parent=1 // pred_check
      _
    $region31: #{tpu_custom_call.1} parent=1 // pred_check_branch
      %105 = sbr.rel (0) target = $region33
    $region32: #{tpu_custom_call.1} parent=1 // pred_region
      %107 = dma.done [#allocation3], 512
    $region33: #{tpu_custom_call.1} parent=1 // pred_fallthru
      _
    // Predicated region
    $region34: #{tpu_custom_call.1} parent=1 // pred_check
      _
    $region35: #{tpu_custom_call.1} parent=1 // pred_check_branch
      %109 = sbr.rel (0) target = $region37
    $region36: #{tpu_custom_call.1} parent=1 // pred_region
      %111 = dma.done [#allocation6], 1024
    $region37: #{tpu_custom_call.1} parent=1 // pred_fallthru
      _
    // Predicated region
    $region38: #{tpu_custom_call.1} parent=1 // pred_check
      _
    $region39: #{tpu_custom_call.1} parent=1 // pred_check_branch
      %113 = sbr.rel (0) target = $region41
    $region40: #{tpu_custom_call.1} parent=1 // pred_region
      %115 = dma.done [#allocation6], 8192
    $region41: #{tpu_custom_call.1} parent=1 // pred_fallthru
      _
    // Predicated region
    $region42: #{tpu_custom_call.1} parent=1 // pred_check
      _
    $region43: #{tpu_custom_call.1} parent=1 // pred_check_branch
      %117 = sbr.rel (0) target = $region45
    $region44: #{tpu_custom_call.1} parent=1 // pred_region
      %119 = dma.done [#allocation9], 256
    $region45: #{tpu_custom_call.1} parent=1 // pred_fallthru
      _
    // Predicated region
    $region46: #{tpu_custom_call.1} parent=1 // pred_check
      _
    $region47: #{tpu_custom_call.1} parent=1 // pred_check_branch
      %121 = sbr.rel (0) target = $region49
    $region48: #{tpu_custom_call.1} parent=1 // pred_region
      %123 = dma.done [#allocation9], 2048
    $region49: #{tpu_custom_call.1} parent=1 // pred_fallthru
      _
    // Predicated region
    $region50: #{tpu_custom_call.1} parent=1 // pred_check
      _
    $region51: #{tpu_custom_call.1} parent=1 // pred_check_branch
      %125 = sbr.rel (0) target = $region53
    $region52: #{tpu_custom_call.1} parent=1 // pred_region
      %127 = dma.done [#allocation12], 2048
    $region53: #{tpu_custom_call.1} parent=1 // pred_fallthru
      _
    // Predicated region
    $region54: #{tpu_custom_call.1} parent=1 // pred_check
      _
    $region55: #{tpu_custom_call.1} parent=1 // pred_check_branch
      %129 = sbr.rel (0) target = $region57
    $region56: #{tpu_custom_call.1} parent=1 // pred_region
      %131 = dma.done [#allocation12], 256
    $region57: #{tpu_custom_call.1} parent=1 // pred_fallthru
      _
    %v133 = vld [vmem:[#allocation13] ss:$0 sm:$0xff]
    %v134 = vld [vmem:[#allocation13 + $0x1] ss:$0 sm:$0xff]
    %s135 = scalar_lea.vmem [#allocation13], 2
    %v136 = vld [vmem:[%s135] ss:$8 sm:$0x3]
    %v137 = vld [vmem:[#allocation13 + $0x3] ss:$0 sm:$0xff]
    %v138 = vld [vmem:[#allocation2] sm:$0xff]
    %v139 = vld [vmem:[#allocation2 + $0x8] sm:$0xff]
    %v140 = vld [vmem:[#allocation2 + $0x10] sm:$0xff]
    %v141 = vld [vmem:[#allocation2 + $0x18] sm:$0xff]
    %v142 = vld [vmem:[#allocation7] sm:$0xf]
    %v143 = vld [vmem:[#allocation7 + $0x4] sm:$0xf]
    %v144 = vld [vmem:[#allocation7 + $0x8] sm:$0xf]
    %v145 = vld [vmem:[#allocation7 + $0xc] sm:$0xf]
    %v146 = vld [vmem:[#allocation7 + $0x10] sm:$0xf]
    %v147 = vld [vmem:[#allocation7 + $0x14] sm:$0xf]
    %v148 = vld [vmem:[#allocation7 + $0x18] sm:$0xf]
    %v149 = vld [vmem:[#allocation7 + $0x1c] sm:$0xf]
    %v150 = vld [vmem:[#allocation7 + $0x20] sm:$0xf]
    %v151 = vld [vmem:[#allocation7 + $0x24] sm:$0xf]
    %v152 = vld [vmem:[#allocation7 + $0x28] sm:$0xf]
    %v153 = vld [vmem:[#allocation7 + $0x2c] sm:$0xf]
    %v154 = vld [vmem:[#allocation7 + $0x30] sm:$0xf]
    %v155 = vld [vmem:[#allocation7 + $0x34] sm:$0xf]
    %v156 = vld [vmem:[#allocation7 + $0x38] sm:$0xf]
    %v157 = vld [vmem:[#allocation7 + $0x3c] sm:$0xf]
    %v158 = vld [vmem:[#allocation7 + $0x40] sm:$0xf]
    %v159 = vld [vmem:[#allocation7 + $0x44] sm:$0xf]
    %v160 = vld [vmem:[#allocation7 + $0x48] sm:$0xf]
    %v161 = vld [vmem:[#allocation7 + $0x4c] sm:$0xf]
    %v162 = vld [vmem:[#allocation7 + $0x50] sm:$0xf]
    %v163 = vld [vmem:[#allocation7 + $0x54] sm:$0xf]
    %v164 = vld [vmem:[#allocation7 + $0x58] sm:$0xf]
    %v165 = vld [vmem:[#allocation7 + $0x5c] sm:$0xf]
    %v166 = vld [vmem:[#allocation7 + $0x60] sm:$0xf]
    %v167 = vld [vmem:[#allocation7 + $0x64] sm:$0xf]
    %v168 = vld [vmem:[#allocation7 + $0x68] sm:$0xf]
    %v169 = vld [vmem:[#allocation7 + $0x6c] sm:$0xf]
    %v170 = vld [vmem:[#allocation7 + $0x70] sm:$0xf]
    %v171 = vld [vmem:[#allocation7 + $0x74] sm:$0xf]
    %v172 = vld [vmem:[#allocation7 + $0x78] sm:$0xf]
    %v173 = vld [vmem:[#allocation7 + $0x7c] sm:$0xf]
    %v174 = vld [vmem:[#allocation7 + $0x80] sm:$0xf]
    %v175 = vld [vmem:[#allocation7 + $0x84] sm:$0xf]
    %v176 = vld [vmem:[#allocation7 + $0x88] sm:$0xf]
    %v177 = vld [vmem:[#allocation7 + $0x8c] sm:$0xf]
    %v178 = vld [vmem:[#allocation7 + $0x90] sm:$0xf]
    %v179 = vld [vmem:[#allocation7 + $0x94] sm:$0xf]
    %v180 = vld [vmem:[#allocation7 + $0x98] sm:$0xf]
    %v181 = vld [vmem:[#allocation7 + $0x9c] sm:$0xf]
    %v182 = vld [vmem:[#allocation7 + $0xa0] sm:$0xf]
    %v183 = vld [vmem:[#allocation7 + $0xa4] sm:$0xf]
    %v184 = vld [vmem:[#allocation7 + $0xa8] sm:$0xf]
    %v185 = vld [vmem:[#allocation7 + $0xac] sm:$0xf]
    %v186 = vld [vmem:[#allocation7 + $0xb0] sm:$0xf]
    %v187 = vld [vmem:[#allocation7 + $0xb4] sm:$0xf]
    %v188 = vld [vmem:[#allocation7 + $0xb8] sm:$0xf]
    %v189 = vld [vmem:[#allocation7 + $0xbc] sm:$0xf]
    %v190 = vld [vmem:[#allocation7 + $0xc0] sm:$0xf]
    %v191 = vld [vmem:[#allocation7 + $0xc4] sm:$0xf]
    %v192 = vld [vmem:[#allocation7 + $0xc8] sm:$0xf]
    %v193 = vld [vmem:[#allocation7 + $0xcc] sm:$0xf]
    %v194 = vld [vmem:[#allocation7 + $0xd0] sm:$0xf]
    %v195 = vld [vmem:[#allocation7 + $0xd4] sm:$0xf]
    %v196 = vld [vmem:[#allocation7 + $0xd8] sm:$0xf]
    %v197 = vld [vmem:[#allocation7 + $0xdc] sm:$0xf]
    %v198 = vld [vmem:[#allocation7 + $0xe0] sm:$0xf]
    %v199 = vld [vmem:[#allocation7 + $0xe4] sm:$0xf]
    %v200 = vld [vmem:[#allocation7 + $0xe8] sm:$0xf]
    %v201 = vld [vmem:[#allocation7 + $0xec] sm:$0xf]
    %v202 = vld [vmem:[#allocation7 + $0xf0] sm:$0xf]
    %v203 = vld [vmem:[#allocation7 + $0xf4] sm:$0xf]
    %v204 = vld [vmem:[#allocation7 + $0xf8] sm:$0xf]
    %v205 = vld [vmem:[#allocation7 + $0xfc] sm:$0xf]
    %v206 = vld [vmem:[#allocation7 + $0x100] sm:$0xf]
    %v207 = vld [vmem:[#allocation7 + $0x104] sm:$0xf]
    %v208 = vld [vmem:[#allocation7 + $0x108] sm:$0xf]
    %v209 = vld [vmem:[#allocation7 + $0x10c] sm:$0xf]
    %v210 = vld [vmem:[#allocation7 + $0x110] sm:$0xf]
    %v211 = vld [vmem:[#allocation7 + $0x114] sm:$0xf]
    %v212 = vld [vmem:[#allocation7 + $0x118] sm:$0xf]
    %v213 = vld [vmem:[#allocation7 + $0x11c] sm:$0xf]
    %v214 = vld [vmem:[#allocation7 + $0x120] sm:$0xf]
    %v215 = vld [vmem:[#allocation7 + $0x124] sm:$0xf]
    %v216 = vld [vmem:[#allocation7 + $0x128] sm:$0xf]
    %v217 = vld [vmem:[#allocation7 + $0x12c] sm:$0xf]
    %v218 = vld [vmem:[#allocation7 + $0x130] sm:$0xf]
    %v219 = vld [vmem:[#allocation7 + $0x134] sm:$0xf]
    %v220 = vld [vmem:[#allocation7 + $0x138] sm:$0xf]
    %v221 = vld [vmem:[#allocation7 + $0x13c] sm:$0xf]
    %v222 = vld [vmem:[#allocation7 + $0x140] sm:$0xf]
    %v223 = vld [vmem:[#allocation7 + $0x144] sm:$0xf]
    %v224 = vld [vmem:[#allocation7 + $0x148] sm:$0xf]
    %v225 = vld [vmem:[#allocation7 + $0x14c] sm:$0xf]
    %v226 = vld [vmem:[#allocation7 + $0x150] sm:$0xf]
    %v227 = vld [vmem:[#allocation7 + $0x154] sm:$0xf]
    %v228 = vld [vmem:[#allocation7 + $0x158] sm:$0xf]
    %v229 = vld [vmem:[#allocation7 + $0x15c] sm:$0xf]
    %v230 = vld [vmem:[#allocation7 + $0x160] sm:$0xf]
    %v231 = vld [vmem:[#allocation7 + $0x164] sm:$0xf]
    %v232 = vld [vmem:[#allocation7 + $0x168] sm:$0xf]
    %v233 = vld [vmem:[#allocation7 + $0x16c] sm:$0xf]
    %v234 = vld [vmem:[#allocation7 + $0x170] sm:$0xf]
    %v235 = vld [vmem:[#allocation7 + $0x174] sm:$0xf]
    %v236 = vld [vmem:[#allocation7 + $0x178] sm:$0xf]
    %v237 = vld [vmem:[#allocation7 + $0x17c] sm:$0xf]
    %v238 = vld [vmem:[#allocation7 + $0x180] sm:$0xf]
    %v239 = vld [vmem:[#allocation7 + $0x184] sm:$0xf]
    %v240 = vld [vmem:[#allocation7 + $0x188] sm:$0xf]
    %v241 = vld [vmem:[#allocation7 + $0x18c] sm:$0xf]
    %v242 = vld [vmem:[#allocation7 + $0x190] sm:$0xf]
    %v243 = vld [vmem:[#allocation7 + $0x194] sm:$0xf]
    %v244 = vld [vmem:[#allocation7 + $0x198] sm:$0xf]
    %v245 = vld [vmem:[#allocation7 + $0x19c] sm:$0xf]
    %v246 = vld [vmem:[#allocation7 + $0x1a0] sm:$0xf]
    %v247 = vld [vmem:[#allocation7 + $0x1a4] sm:$0xf]
    %v248 = vld [vmem:[#allocation7 + $0x1a8] sm:$0xf]
    %v249 = vld [vmem:[#allocation7 + $0x1ac] sm:$0xf]
    %v250 = vld [vmem:[#allocation7 + $0x1b0] sm:$0xf]
    %v251 = vld [vmem:[#allocation7 + $0x1b4] sm:$0xf]
    %v252 = vld [vmem:[#allocation7 + $0x1b8] sm:$0xf]
    %v253 = vld [vmem:[#allocation7 + $0x1bc] sm:$0xf]
    %v254 = vld [vmem:[#allocation7 + $0x1c0] sm:$0xf]
    %v255 = vld [vmem:[#allocation7 + $0x1c4] sm:$0xf]
    %v256 = vld [vmem:[#allocation7 + $0x1c8] sm:$0xf]
    %v257 = vld [vmem:[#allocation7 + $0x1cc] sm:$0xf]
    %v258 = vld [vmem:[#allocation7 + $0x1d0] sm:$0xf]
    %v259 = vld [vmem:[#allocation7 + $0x1d4] sm:$0xf]
    %v260 = vld [vmem:[#allocation7 + $0x1d8] sm:$0xf]
    %v261 = vld [vmem:[#allocation7 + $0x1dc] sm:$0xf]
    %v262 = vld [vmem:[#allocation7 + $0x1e0] sm:$0xf]
    %v263 = vld [vmem:[#allocation7 + $0x1e4] sm:$0xf]
    %v264 = vld [vmem:[#allocation7 + $0x1e8] sm:$0xf]
    %v265 = vld [vmem:[#allocation7 + $0x1ec] sm:$0xf]
    %v266 = vld [vmem:[#allocation7 + $0x1f0] sm:$0xf]
    %v267 = vld [vmem:[#allocation7 + $0x1f4] sm:$0xf]
    %v268 = vld [vmem:[#allocation7 + $0x1f8] sm:$0xf]
    %v269 = vld [vmem:[#allocation7 + $0x1fc] sm:$0xf]
    %v274 = vunpack.c.l.b16 %v138
    %v275 = vunpack.c.h.b16 %v138
    %v276 = vunpack.c.l.b16 %v139
    %v277 = vunpack.c.h.b16 %v139
    %v278 = vunpack.c.l.b16 %v140
    %v279 = vunpack.c.h.b16 %v140
    %v280 = vunpack.c.l.b16 %v141
    %v281 = vunpack.c.h.b16 %v141
    %v282 = vpack.c.b16 %v274, %v274
    %v283 = vpack.c.b16 %v275, %v275
    %v284 = vpack.c.b16 %v276, %v276
    %v285 = vpack.c.b16 %v277, %v277
    %v286 = vpack.c.b16 %v278, %v278
    %v287 = vpack.c.b16 %v279, %v279
    %v288 = vpack.c.b16 %v280, %v280
    %v289 = vpack.c.b16 %v281, %v281
    %v426 = vunpack.c.l.b16 %v142
    %v427 = vunpack.c.l.b16 %v143
    %v428 = vunpack.c.l.b16 %v144
    %v429 = vunpack.c.l.b16 %v145
    %v430 = vunpack.c.l.b16 %v146
    %v431 = vunpack.c.l.b16 %v147
    %v432 = vunpack.c.l.b16 %v148
    %v433 = vunpack.c.l.b16 %v149
    %v434 = vunpack.c.l.b16 %v150
    %v435 = vunpack.c.l.b16 %v151
    %v436 = vunpack.c.l.b16 %v152
    %v437 = vunpack.c.l.b16 %v153
    %v438 = vunpack.c.l.b16 %v154
    %v439 = vunpack.c.l.b16 %v155
    %v440 = vunpack.c.l.b16 %v156
    %v441 = vunpack.c.l.b16 %v157
    %v442 = vunpack.c.l.b16 %v158
    %v443 = vunpack.c.l.b16 %v159
    %v444 = vunpack.c.l.b16 %v160
    %v445 = vunpack.c.l.b16 %v161
    %v446 = vunpack.c.l.b16 %v162
    %v447 = vunpack.c.l.b16 %v163
    %v448 = vunpack.c.l.b16 %v164
    %v449 = vunpack.c.l.b16 %v165
    %v450 = vunpack.c.l.b16 %v166
    %v451 = vunpack.c.l.b16 %v167
    %v452 = vunpack.c.l.b16 %v168
    %v453 = vunpack.c.l.b16 %v169
    %v454 = vunpack.c.l.b16 %v170
    %v455 = vunpack.c.l.b16 %v171
    %v456 = vunpack.c.l.b16 %v172
    %v457 = vunpack.c.l.b16 %v173
    %v458 = vunpack.c.l.b16 %v174
    %v459 = vunpack.c.l.b16 %v175
    %v460 = vunpack.c.l.b16 %v176
    %v461 = vunpack.c.l.b16 %v177
    %v462 = vunpack.c.l.b16 %v178
    %v463 = vunpack.c.l.b16 %v179
    %v464 = vunpack.c.l.b16 %v180
    %v465 = vunpack.c.l.b16 %v181
    %v466 = vunpack.c.l.b16 %v182
    %v467 = vunpack.c.l.b16 %v183
    %v468 = vunpack.c.l.b16 %v184
    %v469 = vunpack.c.l.b16 %v185
    %v470 = vunpack.c.l.b16 %v186
    %v471 = vunpack.c.l.b16 %v187
    %v472 = vunpack.c.l.b16 %v188
    %v473 = vunpack.c.l.b16 %v189
    %v474 = vunpack.c.l.b16 %v190
    %v475 = vunpack.c.l.b16 %v191
    %v476 = vunpack.c.l.b16 %v192
    %v477 = vunpack.c.l.b16 %v193
    %v478 = vunpack.c.l.b16 %v194
    %v479 = vunpack.c.l.b16 %v195
    %v480 = vunpack.c.l.b16 %v196
    %v481 = vunpack.c.l.b16 %v197
    %v482 = vunpack.c.l.b16 %v198
    %v483 = vunpack.c.l.b16 %v199
    %v484 = vunpack.c.l.b16 %v200
    %v485 = vunpack.c.l.b16 %v201
    %v486 = vunpack.c.l.b16 %v202
    %v487 = vunpack.c.l.b16 %v203
    %v488 = vunpack.c.l.b16 %v204
    %v489 = vunpack.c.l.b16 %v205
    %v490 = vunpack.c.l.b16 %v206
    %v491 = vunpack.c.l.b16 %v207
    %v492 = vunpack.c.l.b16 %v208
    %v493 = vunpack.c.l.b16 %v209
    %v494 = vunpack.c.l.b16 %v210
    %v495 = vunpack.c.l.b16 %v211
    %v496 = vunpack.c.l.b16 %v212
    %v497 = vunpack.c.l.b16 %v213
    %v498 = vunpack.c.l.b16 %v214
    %v499 = vunpack.c.l.b16 %v215
    %v500 = vunpack.c.l.b16 %v216
    %v501 = vunpack.c.l.b16 %v217
    %v502 = vunpack.c.l.b16 %v218
    %v503 = vunpack.c.l.b16 %v219
    %v504 = vunpack.c.l.b16 %v220
    %v505 = vunpack.c.l.b16 %v221
    %v506 = vunpack.c.l.b16 %v222
    %v507 = vunpack.c.l.b16 %v223
    %v508 = vunpack.c.l.b16 %v224
    %v509 = vunpack.c.l.b16 %v225
    %v510 = vunpack.c.l.b16 %v226
    %v511 = vunpack.c.l.b16 %v227
    %v512 = vunpack.c.l.b16 %v228
    %v513 = vunpack.c.l.b16 %v229
    %v514 = vunpack.c.l.b16 %v230
    %v515 = vunpack.c.l.b16 %v231
    %v516 = vunpack.c.l.b16 %v232
    %v517 = vunpack.c.l.b16 %v233
    %v518 = vunpack.c.l.b16 %v234
    %v519 = vunpack.c.l.b16 %v235
    %v520 = vunpack.c.l.b16 %v236
    %v521 = vunpack.c.l.b16 %v237
    %v522 = vunpack.c.l.b16 %v238
    %v523 = vunpack.c.l.b16 %v239
    %v524 = vunpack.c.l.b16 %v240
    %v525 = vunpack.c.l.b16 %v241
    %v526 = vunpack.c.l.b16 %v242
    %v527 = vunpack.c.l.b16 %v243
    %v528 = vunpack.c.l.b16 %v244
    %v529 = vunpack.c.l.b16 %v245
    %v530 = vunpack.c.l.b16 %v246
    %v531 = vunpack.c.l.b16 %v247
    %v532 = vunpack.c.l.b16 %v248
    %v533 = vunpack.c.l.b16 %v249
    %v534 = vunpack.c.l.b16 %v250
    %v535 = vunpack.c.l.b16 %v251
    %v536 = vunpack.c.l.b16 %v252
    %v537 = vunpack.c.l.b16 %v253
    %v538 = vunpack.c.l.b16 %v254
    %v539 = vunpack.c.l.b16 %v255
    %v540 = vunpack.c.l.b16 %v256
    %v541 = vunpack.c.l.b16 %v257
    %v542 = vunpack.c.l.b16 %v258
    %v543 = vunpack.c.l.b16 %v259
    %v544 = vunpack.c.l.b16 %v260
    %v545 = vunpack.c.l.b16 %v261
    %v546 = vunpack.c.l.b16 %v262
    %v547 = vunpack.c.l.b16 %v263
    %v548 = vunpack.c.l.b16 %v264
    %v549 = vunpack.c.l.b16 %v265
    %v550 = vunpack.c.l.b16 %v266
    %v551 = vunpack.c.l.b16 %v267
    %v552 = vunpack.c.l.b16 %v268
    %v553 = vunpack.c.l.b16 %v269
    %v554 = vpack.c.b16 %v427, %v426
    %v555 = vpack.c.b16 %v429, %v428
    %v556 = vpack.c.b16 %v431, %v430
    %v557 = vpack.c.b16 %v433, %v432
    %v558 = vpack.c.b16 %v435, %v434
    %v559 = vpack.c.b16 %v437, %v436
    %v560 = vpack.c.b16 %v439, %v438
    %v561 = vpack.c.b16 %v441, %v440
    %v562 = vpack.c.b16 %v443, %v442
    %v563 = vpack.c.b16 %v445, %v444
    %v564 = vpack.c.b16 %v447, %v446
    %v565 = vpack.c.b16 %v449, %v448
    %v566 = vpack.c.b16 %v451, %v450
    %v567 = vpack.c.b16 %v453, %v452
    %v568 = vpack.c.b16 %v455, %v454
    %v569 = vpack.c.b16 %v457, %v456
    %v570 = vpack.c.b16 %v459, %v458
    %v571 = vpack.c.b16 %v461, %v460
    %v572 = vpack.c.b16 %v463, %v462
    %v573 = vpack.c.b16 %v465, %v464
    %v574 = vpack.c.b16 %v467, %v466
    %v575 = vpack.c.b16 %v469, %v468
    %v576 = vpack.c.b16 %v471, %v470
    %v577 = vpack.c.b16 %v473, %v472
    %v578 = vpack.c.b16 %v475, %v474
    %v579 = vpack.c.b16 %v477, %v476
    %v580 = vpack.c.b16 %v479, %v478
    %v581 = vpack.c.b16 %v481, %v480
    %v582 = vpack.c.b16 %v483, %v482
    %v583 = vpack.c.b16 %v485, %v484
    %v584 = vpack.c.b16 %v487, %v486
    %v585 = vpack.c.b16 %v489, %v488
    %v586 = vpack.c.b16 %v491, %v490
    %v587 = vpack.c.b16 %v493, %v492
    %v588 = vpack.c.b16 %v495, %v494
    %v589 = vpack.c.b16 %v497, %v496
    %v590 = vpack.c.b16 %v499, %v498
    %v591 = vpack.c.b16 %v501, %v500
    %v592 = vpack.c.b16 %v503, %v502
    %v593 = vpack.c.b16 %v505, %v504
    %v594 = vpack.c.b16 %v507, %v506
    %v595 = vpack.c.b16 %v509, %v508
    %v596 = vpack.c.b16 %v511, %v510
    %v597 = vpack.c.b16 %v513, %v512
    %v598 = vpack.c.b16 %v515, %v514
    %v599 = vpack.c.b16 %v517, %v516
    %v600 = vpack.c.b16 %v519, %v518
    %v601 = vpack.c.b16 %v521, %v520
    %v602 = vpack.c.b16 %v523, %v522
    %v603 = vpack.c.b16 %v525, %v524
    %v604 = vpack.c.b16 %v527, %v526
    %v605 = vpack.c.b16 %v529, %v528
    %v606 = vpack.c.b16 %v531, %v530
    %v607 = vpack.c.b16 %v533, %v532
    %v608 = vpack.c.b16 %v535, %v534
    %v609 = vpack.c.b16 %v537, %v536
    %v610 = vpack.c.b16 %v539, %v538
    %v611 = vpack.c.b16 %v541, %v540
    %v612 = vpack.c.b16 %v543, %v542
    %v613 = vpack.c.b16 %v545, %v544
    %v614 = vpack.c.b16 %v547, %v546
    %v615 = vpack.c.b16 %v549, %v548
    %v616 = vpack.c.b16 %v551, %v550
    %v617 = vpack.c.b16 %v553, %v552
    %682 = vmatpush.bf16.msra.mxu0 %v561
    %683 = vmatpush.bf16.msra.mxu0 %v560
    %684 = vmatpush.bf16.msra.mxu0 %v559
    %685 = vmatpush.bf16.msra.mxu0 %v558
    %686 = vmatpush.bf16.msra.mxu0 %v557
    %687 = vmatpush.bf16.msra.mxu0 %v556
    %688 = vmatpush.bf16.msra.mxu0 %v555
    %689 = vmatpush.bf16.msra.mxu0 %v554
    %690 = vmatmul.bf16.gmra.mxu0 %v282
    %v691 = vpop.f32.mrf.mxu0
    %v692 = vadd.f32 %v133, %v691
    %v693 = vpop.f32.mrf.mxu0
    %694 = vdwg.mxu0
    %695 = vmatpush.bf16.msra.mxu0 %v569
    %696 = vmatpush.bf16.msra.mxu0 %v568
    %697 = vmatpush.bf16.msra.mxu0 %v567
    %698 = vmatpush.bf16.msra.mxu0 %v566
    %699 = vmatpush.bf16.msra.mxu0 %v565
    %700 = vmatpush.bf16.msra.mxu0 %v564
    %701 = vmatpush.bf16.msra.mxu0 %v563
    %702 = vmatpush.bf16.msra.mxu0 %v562
    %703 = vmatmul.bf16.gmra.mxu0 %v283
    %v704 = vpop.f32.mrf.mxu0
    %v705 = vadd.f32 %v692, %v704
    %v706 = vpop.f32.mrf.mxu0
    %707 = vdwg.mxu0
    %708 = vmatpush.bf16.msra.mxu0 %v577
    %709 = vmatpush.bf16.msra.mxu0 %v576
    %710 = vmatpush.bf16.msra.mxu0 %v575
    %711 = vmatpush.bf16.msra.mxu0 %v574
    %712 = vmatpush.bf16.msra.mxu0 %v573
    %713 = vmatpush.bf16.msra.mxu0 %v572
    %714 = vmatpush.bf16.msra.mxu0 %v571
    %715 = vmatpush.bf16.msra.mxu0 %v570
    %716 = vmatmul.bf16.gmra.mxu0 %v284
    %v717 = vpop.f32.mrf.mxu0
    %v718 = vadd.f32 %v705, %v717
    %v719 = vpop.f32.mrf.mxu0
    %720 = vdwg.mxu0
    %721 = vmatpush.bf16.msra.mxu0 %v585
    %722 = vmatpush.bf16.msra.mxu0 %v584
    %723 = vmatpush.bf16.msra.mxu0 %v583
    %724 = vmatpush.bf16.msra.mxu0 %v582
    %725 = vmatpush.bf16.msra.mxu0 %v581
    %726 = vmatpush.bf16.msra.mxu0 %v580
    %727 = vmatpush.bf16.msra.mxu0 %v579
    %728 = vmatpush.bf16.msra.mxu0 %v578
    %729 = vmatmul.bf16.gmra.mxu0 %v285
    %v730 = vpop.f32.mrf.mxu0
    %v731 = vadd.f32 %v718, %v730
    %v732 = vpop.f32.mrf.mxu0
    %733 = vdwg.mxu0
    %734 = vmatpush.bf16.msra.mxu0 %v593
    %735 = vmatpush.bf16.msra.mxu0 %v592
    %736 = vmatpush.bf16.msra.mxu0 %v591
    %737 = vmatpush.bf16.msra.mxu0 %v590
    %738 = vmatpush.bf16.msra.mxu0 %v589
    %739 = vmatpush.bf16.msra.mxu0 %v588
    %740 = vmatpush.bf16.msra.mxu0 %v587
    %741 = vmatpush.bf16.msra.mxu0 %v586
    %742 = vmatmul.bf16.gmra.mxu0 %v286
    %v743 = vpop.f32.mrf.mxu0
    %v744 = vadd.f32 %v731, %v743
    %v745 = vpop.f32.mrf.mxu0
    %746 = vdwg.mxu0
    %747 = vmatpush.bf16.msra.mxu0 %v601
    %748 = vmatpush.bf16.msra.mxu0 %v600
    %749 = vmatpush.bf16.msra.mxu0 %v599
    %750 = vmatpush.bf16.msra.mxu0 %v598
    %751 = vmatpush.bf16.msra.mxu0 %v597
    %752 = vmatpush.bf16.msra.mxu0 %v596
    %753 = vmatpush.bf16.msra.mxu0 %v595
    %754 = vmatpush.bf16.msra.mxu0 %v594
    %755 = vmatmul.bf16.gmra.mxu0 %v287
    %v756 = vpop.f32.mrf.mxu0
    %v757 = vadd.f32 %v744, %v756
    %v758 = vpop.f32.mrf.mxu0
    %759 = vdwg.mxu0
    %760 = vmatpush.bf16.msra.mxu0 %v609
    %761 = vmatpush.bf16.msra.mxu0 %v608
    %762 = vmatpush.bf16.msra.mxu0 %v607
    %763 = vmatpush.bf16.msra.mxu0 %v606
    %764 = vmatpush.bf16.msra.mxu0 %v605
    %765 = vmatpush.bf16.msra.mxu0 %v604
    %766 = vmatpush.bf16.msra.mxu0 %v603
    %767 = vmatpush.bf16.msra.mxu0 %v602
    %768 = vmatmul.bf16.gmra.mxu0 %v288
    %v769 = vpop.f32.mrf.mxu0
    %v770 = vadd.f32 %v757, %v769
    %v771 = vpop.f32.mrf.mxu0
    %772 = vdwg.mxu0
    %773 = vmatpush.bf16.msra.mxu0 %v617
    %774 = vmatpush.bf16.msra.mxu0 %v616
    %775 = vmatpush.bf16.msra.mxu0 %v615
    %776 = vmatpush.bf16.msra.mxu0 %v614
    %777 = vmatpush.bf16.msra.mxu0 %v613
    %778 = vmatpush.bf16.msra.mxu0 %v612
    %779 = vmatpush.bf16.msra.mxu0 %v611
    %780 = vmatpush.bf16.msra.mxu0 %v610
    %781 = vmatmul.bf16.gmra.mxu0 %v289
    %v782 = vpop.f32.mrf.mxu0
    %v783 = vadd.f32 %v770, %v782
    %v784 = vpop.f32.mrf.mxu0
    %785 = vdwg.mxu0
    %v786 = vld [vmem:[#allocation5] sm:$0xff]
    %v787 = vld [vmem:[#allocation5 + $0x8] sm:$0xff]
    %v788 = vld [vmem:[#allocation5 + $0x10] sm:$0xff]
    %v789 = vld [vmem:[#allocation5 + $0x18] sm:$0xff]
    %v790 = vld [vmem:[#allocation5 + $0x20] sm:$0xff]
    %v791 = vld [vmem:[#allocation5 + $0x28] sm:$0xff]
    %v792 = vld [vmem:[#allocation5 + $0x30] sm:$0xff]
    %v793 = vld [vmem:[#allocation5 + $0x38] sm:$0xff]
    %vm794 = vcmask 261120
    %v795 = vsel %vm794, %v786, 0.0
    %v796 = vrot.slane %v795, 4
    %v797 = vadd.f32 %v795, %v796
    %v798 = vrot.slane %v797, 2
    %v799 = vadd.f32 %v797, %v798
    %v800 = vrot.slane %v799, 1
    %v801 = vadd.f32 %v799, %v800
    %v802 = vsel %vm794, %v787, 0.0
    %v803 = vrot.slane %v802, 4
    %v804 = vadd.f32 %v802, %v803
    %v805 = vrot.slane %v804, 2
    %v806 = vadd.f32 %v804, %v805
    %v807 = vrot.slane %v806, 1
    %v808 = vadd.f32 %v806, %v807
    %v809 = vsel %vm794, %v788, 0.0
    %v810 = vrot.slane %v809, 4
    %v811 = vadd.f32 %v809, %v810
    %v812 = vrot.slane %v811, 2
    %v813 = vadd.f32 %v811, %v812
    %v814 = vrot.slane %v813, 1
    %v815 = vadd.f32 %v813, %v814
    %v816 = vsel %vm794, %v789, 0.0
    %v817 = vrot.slane %v816, 4
    %v818 = vadd.f32 %v816, %v817
    %v819 = vrot.slane %v818, 2
    %v820 = vadd.f32 %v818, %v819
    %v821 = vrot.slane %v820, 1
    %v822 = vadd.f32 %v820, %v821
    %v823 = vsel %vm794, %v790, 0.0
    %v824 = vrot.slane %v823, 4
    %v825 = vadd.f32 %v823, %v824
    %v826 = vrot.slane %v825, 2
    %v827 = vadd.f32 %v825, %v826
    %v828 = vrot.slane %v827, 1
    %v829 = vadd.f32 %v827, %v828
    %v830 = vsel %vm794, %v791, 0.0
    %v831 = vrot.slane %v830, 4
    %v832 = vadd.f32 %v830, %v831
    %v833 = vrot.slane %v832, 2
    %v834 = vadd.f32 %v832, %v833
    %v835 = vrot.slane %v834, 1
    %v836 = vadd.f32 %v834, %v835
    %v837 = vsel %vm794, %v792, 0.0
    %v838 = vrot.slane %v837, 4
    %v839 = vadd.f32 %v837, %v838
    %v840 = vrot.slane %v839, 2
    %v841 = vadd.f32 %v839, %v840
    %v842 = vrot.slane %v841, 1
    %v843 = vadd.f32 %v841, %v842
    %v844 = vsel %vm794, %v793, 0.0
    %v845 = vrot.slane %v844, 4
    %v846 = vadd.f32 %v844, %v845
    %v847 = vrot.slane %v846, 2
    %v848 = vadd.f32 %v846, %v847
    %v849 = vrot.slane %v848, 1
    %v850 = vadd.f32 %v848, %v849
    %v851 = vmul.f32 %v801, 0.125
    %v852 = vmul.f32 %v808, 0.125
    %v853 = vmul.f32 %v815, 0.125
    %v854 = vmul.f32 %v822, 0.125
    %v855 = vmul.f32 %v829, 0.125
    %v856 = vmul.f32 %v836, 0.125
    %v857 = vmul.f32 %v843, 0.125
    %v858 = vmul.f32 %v850, 0.125
    %v859 = vpack.c.bf16 %v851, %v851
    %v860 = vpack.c.bf16 %v852, %v852
    %v861 = vpack.c.bf16 %v853, %v853
    %v862 = vpack.c.bf16 %v854, %v854
    %v863 = vpack.c.bf16 %v855, %v855
    %v864 = vpack.c.bf16 %v856, %v856
    %v865 = vpack.c.bf16 %v857, %v857
    %v866 = vpack.c.bf16 %v858, %v858
    %v867 = vld [vmem:[#allocation8] sm:$0xf]
    %v868 = vld [vmem:[#allocation8 + $0x4] sm:$0xf]
    %v869 = vld [vmem:[#allocation8 + $0x8] sm:$0xf]
    %v870 = vld [vmem:[#allocation8 + $0xc] sm:$0xf]
    %v879 = vunpack.c.l.b16 %v859
    %v880 = vunpack.c.l.b16 %v860
    %v881 = vunpack.c.l.b16 %v861
    %v882 = vunpack.c.l.b16 %v862
    %v883 = vunpack.c.l.b16 %v863
    %v884 = vunpack.c.l.b16 %v864
    %v885 = vunpack.c.l.b16 %v865
    %v886 = vunpack.c.l.b16 %v866
    %vm887 = vcmask 1041409
    %v888 = vsel %vm887, %v880, %v879
    %vm889 = vcmask 1042434
    %v890 = vsel %vm889, %v881, %v888
    %vm891 = vcmask 1043459
    %v892 = vsel %vm891, %v882, %v890
    %vm893 = vcmask 1044484
    %v894 = vsel %vm893, %v883, %v892
    %vm895 = vcmask 1045509
    %v896 = vsel %vm895, %v884, %v894
    %vm897 = vcmask 1046534
    %v898 = vsel %vm897, %v885, %v896
    %vm899 = vcmask 1047559
    %v900 = vsel %vm899, %v886, %v898
    %v901 = vpack.c.b16 %v900, %v900
    %v906 = vunpack.c.l.b16 %v867
    %v907 = vunpack.c.l.b16 %v868
    %v908 = vunpack.c.l.b16 %v869
    %v909 = vunpack.c.l.b16 %v870
    %v910 = vpack.c.b16 %v907, %v906
    %v911 = vpack.c.b16 %v909, %v908
    %v915 = vsel %vm794, %v901, 0
    %917 = vmatpush.bf16.msra.mxu0 0
    %918 = vmatpush.bf16.msra.mxu0 0
    %919 = vmatpush.bf16.msra.mxu0 0
    %920 = vmatpush.bf16.msra.mxu0 0
    %921 = vmatpush.bf16.msra.mxu0 0
    %922 = vmatpush.bf16.msra.mxu0 0
    %923 = vmatpush.bf16.msra.mxu0 %v911
    %924 = vmatpush.bf16.msra.mxu0 %v910
    %925 = vmatmul.bf16.gmra.mxu0 %v915
    %v926 = vpop.f32.mrf.mxu0
    %v927 = vadd.f32 %v134, %v926
    %v928 = vpop.f32.mrf.mxu0
    %929 = vdwg.mxu0
    %v930 = vmul.f32 %v783, %v927
    %v931 = vtanh.pop %v930
    %v932 = vpack.c.bf16 %v931, %v931
    %v933 = vld [vmem:[#allocation10] sm:$0xff]
    %v934 = vld [vmem:[#allocation10 + $0x8] sm:$0xff]
    %v935 = vld [vmem:[#allocation10 + $0x10] sm:$0xff]
    %v936 = vld [vmem:[#allocation10 + $0x18] sm:$0xff]
    %v937 = vld [vmem:[#allocation10 + $0x20] sm:$0xff]
    %v938 = vld [vmem:[#allocation10 + $0x28] sm:$0xff]
    %v939 = vld [vmem:[#allocation10 + $0x30] sm:$0xff]
    %v940 = vld [vmem:[#allocation10 + $0x38] sm:$0xff]
    %v941 = vld [vmem:[#allocation10 + $0x40] sm:$0xff]
    %v942 = vld [vmem:[#allocation10 + $0x48] sm:$0xff]
    %v943 = vld [vmem:[#allocation10 + $0x50] sm:$0xff]
    %v944 = vld [vmem:[#allocation10 + $0x58] sm:$0xff]
    %v945 = vld [vmem:[#allocation10 + $0x60] sm:$0xff]
    %v946 = vld [vmem:[#allocation10 + $0x68] sm:$0xff]
    %v947 = vld [vmem:[#allocation10 + $0x70] sm:$0xff]
    %v948 = vld [vmem:[#allocation10 + $0x78] sm:$0xff]
    %v950 = vperm.slane %v136, 0
    %v951 = vperm.slane %v136, 1
    %v970 = vunpack.c.l.b16 %v933
    %v971 = vunpack.c.h.b16 %v933
    %v972 = vunpack.c.l.b16 %v934
    %v973 = vunpack.c.h.b16 %v934
    %v974 = vunpack.c.l.b16 %v935
    %v975 = vunpack.c.h.b16 %v935
    %v976 = vunpack.c.l.b16 %v936
    %v977 = vunpack.c.h.b16 %v936
    %v978 = vunpack.c.l.b16 %v937
    %v979 = vunpack.c.h.b16 %v937
    %v980 = vunpack.c.l.b16 %v938
    %v981 = vunpack.c.h.b16 %v938
    %v982 = vunpack.c.l.b16 %v939
    %v983 = vunpack.c.h.b16 %v939
    %v984 = vunpack.c.l.b16 %v940
    %v985 = vunpack.c.h.b16 %v940
    %v986 = vunpack.c.l.b16 %v941
    %v987 = vunpack.c.h.b16 %v941
    %v988 = vunpack.c.l.b16 %v942
    %v989 = vunpack.c.h.b16 %v942
    %v990 = vunpack.c.l.b16 %v943
    %v991 = vunpack.c.h.b16 %v943
    %v992 = vunpack.c.l.b16 %v944
    %v993 = vunpack.c.h.b16 %v944
    %v994 = vunpack.c.l.b16 %v945
    %v995 = vunpack.c.h.b16 %v945
    %v996 = vunpack.c.l.b16 %v946
    %v997 = vunpack.c.h.b16 %v946
    %v998 = vunpack.c.l.b16 %v947
    %v999 = vunpack.c.h.b16 %v947
    %v1000 = vunpack.c.l.b16 %v948
    %v1001 = vunpack.c.h.b16 %v948
    %v1002 = vpack.c.b16 %v972, %v970
    %v1003 = vpack.c.b16 %v973, %v971
    %v1004 = vpack.c.b16 %v976, %v974
    %v1005 = vpack.c.b16 %v977, %v975
    %v1006 = vpack.c.b16 %v980, %v978
    %v1007 = vpack.c.b16 %v981, %v979
    %v1008 = vpack.c.b16 %v984, %v982
    %v1009 = vpack.c.b16 %v985, %v983
    %v1010 = vpack.c.b16 %v988, %v986
    %v1011 = vpack.c.b16 %v989, %v987
    %v1012 = vpack.c.b16 %v992, %v990
    %v1013 = vpack.c.b16 %v993, %v991
    %v1014 = vpack.c.b16 %v996, %v994
    %v1015 = vpack.c.b16 %v997, %v995
    %v1016 = vpack.c.b16 %v1000, %v998
    %v1017 = vpack.c.b16 %v1001, %v999
    %1034 = vmatpush.bf16.msra.mxu0 %v1016
    %1035 = vmatpush.bf16.msra.mxu0 %v1014
    %1036 = vmatpush.bf16.msra.mxu0 %v1012
    %1037 = vmatpush.bf16.msra.mxu0 %v1010
    %1038 = vmatpush.bf16.msra.mxu0 %v1008
    %1039 = vmatpush.bf16.msra.mxu0 %v1006
    %1040 = vmatpush.bf16.msra.mxu0 %v1004
    %1041 = vmatpush.bf16.msra.mxu0 %v1002
    %1042 = vmatmul.bf16.gmra.mxu0 %v932
    %v1043 = vpop.f32.mrf.mxu0
    %v1044 = vadd.f32 %v950, %v1043
    %v1045 = vpop.f32.mrf.mxu0
    %1046 = vdwg.mxu0
    %1047 = vmatpush.bf16.msra.mxu0 %v1017
    %1048 = vmatpush.bf16.msra.mxu0 %v1015
    %1049 = vmatpush.bf16.msra.mxu0 %v1013
    %1050 = vmatpush.bf16.msra.mxu0 %v1011
    %1051 = vmatpush.bf16.msra.mxu0 %v1009
    %1052 = vmatpush.bf16.msra.mxu0 %v1007
    %1053 = vmatpush.bf16.msra.mxu0 %v1005
    %1054 = vmatpush.bf16.msra.mxu0 %v1003
    %1055 = vmatmul.bf16.gmra.mxu0 %v932
    %v1056 = vpop.f32.mrf.mxu0
    %v1057 = vadd.f32 %v951, %v1056
    %v1058 = vpop.f32.mrf.mxu0
    %1059 = vdwg.mxu0
    %v1060 = vtanh.pop %v1044
    %v1061 = vtanh.pop %v1057
    %v1062 = vpack.c.bf16 %v1060, %v1060
    %v1063 = vpack.c.bf16 %v1061, %v1061
    %v1064 = vld [vmem:[#allocation11] sm:$0xf]
    %v1065 = vld [vmem:[#allocation11 + $0x4] sm:$0xf]
    %v1066 = vld [vmem:[#allocation11 + $0x8] sm:$0xf]
    %v1067 = vld [vmem:[#allocation11 + $0xc] sm:$0xf]
    %v1068 = vld [vmem:[#allocation11 + $0x10] sm:$0xf]
    %v1069 = vld [vmem:[#allocation11 + $0x14] sm:$0xf]
    %v1070 = vld [vmem:[#allocation11 + $0x18] sm:$0xf]
    %v1071 = vld [vmem:[#allocation11 + $0x1c] sm:$0xf]
    %v1072 = vld [vmem:[#allocation11 + $0x20] sm:$0xf]
    %v1073 = vld [vmem:[#allocation11 + $0x24] sm:$0xf]
    %v1074 = vld [vmem:[#allocation11 + $0x28] sm:$0xf]
    %v1075 = vld [vmem:[#allocation11 + $0x2c] sm:$0xf]
    %v1076 = vld [vmem:[#allocation11 + $0x30] sm:$0xf]
    %v1077 = vld [vmem:[#allocation11 + $0x34] sm:$0xf]
    %v1078 = vld [vmem:[#allocation11 + $0x38] sm:$0xf]
    %v1079 = vld [vmem:[#allocation11 + $0x3c] sm:$0xf]
    %v1080 = vld [vmem:[#allocation11 + $0x40] sm:$0xf]
    %v1081 = vld [vmem:[#allocation11 + $0x44] sm:$0xf]
    %v1082 = vld [vmem:[#allocation11 + $0x48] sm:$0xf]
    %v1083 = vld [vmem:[#allocation11 + $0x4c] sm:$0xf]
    %v1084 = vld [vmem:[#allocation11 + $0x50] sm:$0xf]
    %v1085 = vld [vmem:[#allocation11 + $0x54] sm:$0xf]
    %v1086 = vld [vmem:[#allocation11 + $0x58] sm:$0xf]
    %v1087 = vld [vmem:[#allocation11 + $0x5c] sm:$0xf]
    %v1088 = vld [vmem:[#allocation11 + $0x60] sm:$0xf]
    %v1089 = vld [vmem:[#allocation11 + $0x64] sm:$0xf]
    %v1090 = vld [vmem:[#allocation11 + $0x68] sm:$0xf]
    %v1091 = vld [vmem:[#allocation11 + $0x6c] sm:$0xf]
    %v1092 = vld [vmem:[#allocation11 + $0x70] sm:$0xf]
    %v1093 = vld [vmem:[#allocation11 + $0x74] sm:$0xf]
    %v1094 = vld [vmem:[#allocation11 + $0x78] sm:$0xf]
    %v1095 = vld [vmem:[#allocation11 + $0x7c] sm:$0xf]
    %v1128 = vunpack.c.l.b16 %v1064
    %v1129 = vunpack.c.l.b16 %v1065
    %v1130 = vunpack.c.l.b16 %v1066
    %v1131 = vunpack.c.l.b16 %v1067
    %v1132 = vunpack.c.l.b16 %v1068
    %v1133 = vunpack.c.l.b16 %v1069
    %v1134 = vunpack.c.l.b16 %v1070
    %v1135 = vunpack.c.l.b16 %v1071
    %v1136 = vunpack.c.l.b16 %v1072
    %v1137 = vunpack.c.l.b16 %v1073
    %v1138 = vunpack.c.l.b16 %v1074
    %v1139 = vunpack.c.l.b16 %v1075
    %v1140 = vunpack.c.l.b16 %v1076
    %v1141 = vunpack.c.l.b16 %v1077
    %v1142 = vunpack.c.l.b16 %v1078
    %v1143 = vunpack.c.l.b16 %v1079
    %v1144 = vunpack.c.l.b16 %v1080
    %v1145 = vunpack.c.l.b16 %v1081
    %v1146 = vunpack.c.l.b16 %v1082
    %v1147 = vunpack.c.l.b16 %v1083
    %v1148 = vunpack.c.l.b16 %v1084
    %v1149 = vunpack.c.l.b16 %v1085
    %v1150 = vunpack.c.l.b16 %v1086
    %v1151 = vunpack.c.l.b16 %v1087
    %v1152 = vunpack.c.l.b16 %v1088
    %v1153 = vunpack.c.l.b16 %v1089
    %v1154 = vunpack.c.l.b16 %v1090
    %v1155 = vunpack.c.l.b16 %v1091
    %v1156 = vunpack.c.l.b16 %v1092
    %v1157 = vunpack.c.l.b16 %v1093
    %v1158 = vunpack.c.l.b16 %v1094
    %v1159 = vunpack.c.l.b16 %v1095
    %v1160 = vpack.c.b16 %v1129, %v1128
    %v1161 = vpack.c.b16 %v1131, %v1130
    %v1162 = vpack.c.b16 %v1133, %v1132
    %v1163 = vpack.c.b16 %v1135, %v1134
    %v1164 = vpack.c.b16 %v1137, %v1136
    %v1165 = vpack.c.b16 %v1139, %v1138
    %v1166 = vpack.c.b16 %v1141, %v1140
    %v1167 = vpack.c.b16 %v1143, %v1142
    %v1168 = vpack.c.b16 %v1145, %v1144
    %v1169 = vpack.c.b16 %v1147, %v1146
    %v1170 = vpack.c.b16 %v1149, %v1148
    %v1171 = vpack.c.b16 %v1151, %v1150
    %v1172 = vpack.c.b16 %v1153, %v1152
    %v1173 = vpack.c.b16 %v1155, %v1154
    %v1174 = vpack.c.b16 %v1157, %v1156
    %v1175 = vpack.c.b16 %v1159, %v1158
    %1192 = vmatpush.bf16.msra.mxu0 %v1167
    %1193 = vmatpush.bf16.msra.mxu0 %v1166
    %1194 = vmatpush.bf16.msra.mxu0 %v1165
    %1195 = vmatpush.bf16.msra.mxu0 %v1164
    %1196 = vmatpush.bf16.msra.mxu0 %v1163
    %1197 = vmatpush.bf16.msra.mxu0 %v1162
    %1198 = vmatpush.bf16.msra.mxu0 %v1161
    %1199 = vmatpush.bf16.msra.mxu0 %v1160
    %1200 = vmatmul.bf16.gmra.mxu0 %v1062
    %v1201 = vpop.f32.mrf.mxu0
    %v1202 = vadd.f32 %v137, %v1201
    %v1203 = vpop.f32.mrf.mxu0
    %1204 = vdwg.mxu0
    %1205 = vmatpush.bf16.msra.mxu0 %v1175
    %1206 = vmatpush.bf16.msra.mxu0 %v1174
    %1207 = vmatpush.bf16.msra.mxu0 %v1173
    %1208 = vmatpush.bf16.msra.mxu0 %v1172
    %1209 = vmatpush.bf16.msra.mxu0 %v1171
    %1210 = vmatpush.bf16.msra.mxu0 %v1170
    %1211 = vmatpush.bf16.msra.mxu0 %v1169
    %1212 = vmatpush.bf16.msra.mxu0 %v1168
    %1213 = vmatmul.bf16.gmra.mxu0 %v1063
    %v1214 = vpop.f32.mrf.mxu0
    %v1215 = vadd.f32 %v1202, %v1214
    %v1216 = vpop.f32.mrf.mxu0
    %1217 = vdwg.mxu0
    %1218 = vst [vmem:[#allocation14] sm:$0xff] %v1215
    // Predicated region
    $region58: #{tpu_custom_call.1} parent=1 // pred_check
      _
    $region59: #{tpu_custom_call.1} parent=1 // pred_check_branch
      %1220 = sbr.rel (0) target = $region61
    $region60: #{tpu_custom_call.1} parent=1 // pred_region
      %1222 = vsyncadd [#allocation4], 0
      %s1224 = sshll.u32 [#allocation14], 4
      %s1225 = int_to_ptr.vmem [resolvable:$true] %s1224
      %s1226 = sshll.u32 %s7, 4
      %s1227 = int_to_ptr.hbm [resolvable:$true] %s1226
      %1229 = dma.vmem_to_hbm [thread:$0]  %s1225, 128, %s1227, [#allocation4]
    $region61: #{tpu_custom_call.1} parent=1 // pred_fallthru
      _
    // Predicated region
    $region62: #{tpu_custom_call.1} parent=1 // pred_check
      _
    $region63: #{tpu_custom_call.1} parent=1 // pred_check_branch
      %1231 = sbr.rel (0) target = $region65
    $region64: #{tpu_custom_call.1} parent=1 // pred_region
      %1233 = dma.done [#allocation4], 128
    $region65: #{tpu_custom_call.1} parent=1 // pred_fallthru
      _
    %1234 = vsyncpa [#allocation3], 1
    %1235 = vsyncpa [#allocation6], 1
    %1236 = vsyncpa [#allocation9], 1
    %1237 = vsyncpa [#allocation12], 1
    %1238 = vsyncpa [#allocation4], 1

</llo_original>
